<compile_context>
chip_gen: v7x
topology: tpu7x:2x2x1
jax: 0.10.0
libtpu: 0.0.40
codegen_flags: <defaults>
</compile_context>

<pallas_src>
import functools
import math

import jax
import jax.numpy as jnp
from jax.experimental import pallas as pl
from jax.experimental.pallas import tpu as pltpu


def _rmlm_kernel(f_ref, g_ref, rf_ref, rg_ref, o_ref, *, scale):
    # Two small full-K matmuls on the MXU (f32 accumulation), then the
    # elementwise multiply + scale on the VPU, cast to the output dtype.
    fr = jnp.dot(f_ref[...], rf_ref[...], preferred_element_type=jnp.float32)
    gr = jnp.dot(g_ref[...], rg_ref[...], preferred_element_type=jnp.float32)
    o_ref[...] = (fr * gr * scale).astype(o_ref.dtype)


def _choose_tile_n(output_dim, per_col_bytes, vmem_budget_bytes):
    """Largest lane-multiple tile of output_dim that fits VMEM and keeps >=2 steps."""
    candidates = [t for t in range(128, output_dim + 1, 128) if output_dim % t == 0]
    if not candidates:
        # output_dim < 128 or not a multiple of 128: single full-width block
        # (full-extent block shapes are exempt from the (8,128) constraint).
        return output_dim
    best = candidates[0]
    for t in candidates:
        if t * per_col_bytes > vmem_budget_bytes:
            break  # candidates are increasing; bigger tiles only get worse
        if output_dim // t >= 2:
            # Keep at least 2 grid steps so the "parallel" output_dim axis can
            # be sharded across TensorCores (v7x has 2 TCs per chip).
            best = t
    return best


def randomized_multilinear_map(
    f,
    g,
    Rf,
    Rg,
    *,
    tile_n=None,
    tile_b=None,
    vmem_limit_bytes=48 * 1024 * 1024,  # > default scoped 16/32 MiB, < v7x 64 MiB physical
):
    """out[b, d] = (f @ Rf)[b, d] * (g @ Rg)[b, d] / sqrt(output_dim)."""
    B, features_dim = f.shape
    Bg, num_classes = g.shape
    assert B == Bg
    assert Rf.shape[0] == features_dim
    assert Rg.shape[0] == num_classes
    output_dim = Rf.shape[1]
    assert Rg.shape[1] == output_dim

    itemsize = lambda a: jnp.dtype(a.dtype).itemsize
    out_dtype = f.dtype

    # Batch tiling: full-batch resident for small B; tile at 256 for large B so
    # the output tile / resident f do not eat the VMEM budget meant for wide
    # Rf/Rg tiles (no effect at small B; ragged last block is masked by Pallas).
    if tile_b is None:
        tile_b = B if B <= 256 else 256
    b_steps = pl.cdiv(B, tile_b)

    # Output_dim tiling: the biggest multiple of 128 dividing output_dim whose
    # double-buffered Rf/Rg/out tiles (plus resident f/g) fit in ~75% of the
    # scoped VMEM limit, while keeping >=2 grid steps when possible.
    if tile_n is None:
        per_col_bytes = (
            2 * features_dim * itemsize(Rf)          # Rf tile, double-buffered
            + 2 * num_classes * itemsize(Rg)         # Rg tile, double-buffered
            + 2 * tile_b * jnp.dtype(out_dtype).itemsize  # out tile, double-buffered
        )
        resident_bytes = 2 * tile_b * (
            features_dim * itemsize(f) + num_classes * itemsize(g)
        )
        budget = int(vmem_limit_bytes * 0.75) - resident_bytes
        tile_n = _choose_tile_n(output_dim, per_col_bytes, budget)
    assert output_dim % tile_n == 0
    n_steps = output_dim // tile_n

    scale = 1.0 / math.sqrt(float(output_dim))
    kernel = functools.partial(_rmlm_kernel, scale=scale)

    # Advisory cost: two tiny matmuls + one elementwise pass; bytes dominated
    # by streaming Rf/Rg once plus reading f/g and writing the output.
    cost = pl.CostEstimate(
        flops=2 * B * (features_dim + num_classes) * output_dim + B * output_dim,
        transcendentals=0,
        bytes_accessed=(
            Rf.size * itemsize(Rf)
            + Rg.size * itemsize(Rg)
            + f.size * itemsize(f)
            + g.size * itemsize(g)
            + B * output_dim * jnp.dtype(out_dtype).itemsize
        ),
    )

    # TODO(synk): if a profile still shows exposed DMA after widening tile_n,
    # add pipeline_mode=pl.Buffered(3) on the Rf/Rg BlockSpecs (VMEM permitting).
    return pl.pallas_call(
        kernel,
        out_shape=jax.ShapeDtypeStruct((B, output_dim), out_dtype),
        grid_spec=pltpu.PrefetchScalarGridSpec(
            num_scalar_prefetch=0,
            grid=(b_steps, n_steps),  # output_dim axis last (fastest): f/g stay resident
            in_specs=[
                pl.BlockSpec((tile_b, features_dim), lambda i, j: (i, 0)),     # f
                pl.BlockSpec((tile_b, num_classes), lambda i, j: (i, 0)),      # g
                pl.BlockSpec((features_dim, tile_n), lambda i, j: (0, j)),     # Rf tile
                pl.BlockSpec((num_classes, tile_n), lambda i, j: (0, j)),      # Rg tile
            ],
            out_specs=pl.BlockSpec((tile_b, tile_n), lambda i, j: (i, j)),
        ),
        compiler_params=pltpu.CompilerParams(
            dimension_semantics=("parallel", "parallel"),
            vmem_limit_bytes=vmem_limit_bytes,
        ),
        cost_estimate=cost,
    )(f, g, Rf, Rg)


if __name__ == "__main__":
    # Small, module-consistent shapes.
    batch = 8
    features_dim = 32
    num_classes = 8
    output_dim = 1024

    key = jax.random.PRNGKey(0)
    k_f, k_g, k_rf, k_rg = jax.random.split(key, 4)

    f = jax.random.normal(k_f, (batch, features_dim), dtype=jnp.float32)
    g = jax.random.normal(k_g, (batch, num_classes), dtype=jnp.float32)
    # Deterministic stand-ins for torch.randn(features_dim, output_dim) etc.
    Rf = jax.random.normal(k_rf, (features_dim, output_dim), dtype=jnp.float32)
    Rg = jax.random.normal(k_rg, (num_classes, output_dim), dtype=jnp.float32)

    out = randomized_multilinear_map(f, g, Rf, Rg)
    out = jax.block_until_ready(out)

    # Reference check in plain JAX.
    ref = (f @ Rf) * (g @ Rg) / jnp.sqrt(jnp.float32(output_dim))
    assert out.shape == (batch, output_dim)
    assert jnp.allclose(out, ref, atol=1e-4, rtol=1e-4)

    print("KERNEL_OK")
</pallas_src>

<mosaic_0001>
module attributes {stable_mosaic.version = 11 : i64} {
  func.func @_rmlm_kernel(%arg0: i32, %arg1: i32, %arg2: memref<8x32xf32, #tpu.memory_space<vmem>>, %arg3: memref<8x8xf32, #tpu.memory_space<vmem>>, %arg4: memref<32x512xf32, #tpu.memory_space<vmem>>, %arg5: memref<8x512xf32, #tpu.memory_space<vmem>>, %arg6: memref<8x512xf32, #tpu.memory_space<vmem>>) attributes {dimension_semantics = [#tpu.dimension_semantics<parallel>, #tpu.dimension_semantics<parallel>], iteration_bounds = array<i64: 1, 2>, scalar_prefetch = 0 : i64, scratch_operands = 0 : i64, tpu.core_type = #tpu.core_type<tc>, window_params = [{transform_indices = @transform_0, window_bounds = array<i64: 8, 32>}, {transform_indices = @transform_1, window_bounds = array<i64: 8, 8>}, {transform_indices = @transform_2, window_bounds = array<i64: 32, 512>}, {transform_indices = @transform_3, window_bounds = array<i64: 8, 512>}, {transform_indices = @transform_4, window_bounds = array<i64: 8, 512>}]} {
    %c0 = arith.constant 0 : index
    %c0_0 = arith.constant 0 : index
    %0 = vector.load %arg2[%c0, %c0_0] : memref<8x32xf32, #tpu.memory_space<vmem>>, vector<8x32xf32>
    %c0_1 = arith.constant 0 : index
    %c0_2 = arith.constant 0 : index
    %1 = vector.load %arg4[%c0_1, %c0_2] : memref<32x512xf32, #tpu.memory_space<vmem>>, vector<32x512xf32>
    %cst = arith.constant dense<0.000000e+00> : vector<8x512xf32>
    %2 = tpu.matmul %0, %1, %cst {dimension_numbers = #tpu.dot_dimension_numbers<[1], [0], [0], [1], [0, 0, 1, 1], [], []>} : vector<8x32xf32>, vector<32x512xf32>, vector<8x512xf32> -> vector<8x512xf32>
    %c0_3 = arith.constant 0 : index
    %c0_4 = arith.constant 0 : index
    %3 = vector.load %arg3[%c0_3, %c0_4] : memref<8x8xf32, #tpu.memory_space<vmem>>, vector<8x8xf32>
    %c0_5 = arith.constant 0 : index
    %c0_6 = arith.constant 0 : index
    %4 = vector.load %arg5[%c0_5, %c0_6] : memref<8x512xf32, #tpu.memory_space<vmem>>, vector<8x512xf32>
    %cst_7 = arith.constant dense<0.000000e+00> : vector<8x512xf32>
    %5 = tpu.matmul %3, %4, %cst_7 {dimension_numbers = #tpu.dot_dimension_numbers<[1], [0], [0], [1], [0, 0, 1, 1], [], []>} : vector<8x8xf32>, vector<8x512xf32>, vector<8x512xf32> -> vector<8x512xf32>
    %6 = arith.mulf %2, %5 : vector<8x512xf32>
    %cst_8 = arith.constant 3.125000e-02 : f32
    %7 = vector.broadcast %cst_8 : f32 to vector<8x512xf32>
    %8 = arith.mulf %6, %7 : vector<8x512xf32>
    %c0_9 = arith.constant 0 : index
    %c0_10 = arith.constant 0 : index
    %9 = vector.load %arg6[%c0_9, %c0_10] : memref<8x512xf32, #tpu.memory_space<vmem>>, vector<8x512xf32>
    tpu.vector_store %arg6[%c0_9, %c0_10], %8 {strides = array<i32>} : memref<8x512xf32, #tpu.memory_space<vmem>>, vector<8x512xf32>,
    return
  }
  func.func @transform_0(%arg0: i32, %arg1: i32) -> (i32, i32) {
    %c0_i32 = arith.constant 0 : i32
    %c0_i32_0 = arith.constant 0 : i32
    return %arg0, %c0_i32 : i32, i32
  }
  func.func @transform_1(%arg0: i32, %arg1: i32) -> (i32, i32) {
    %c0_i32 = arith.constant 0 : i32
    %c0_i32_0 = arith.constant 0 : i32
    return %arg0, %c0_i32 : i32, i32
  }
  func.func @transform_2(%arg0: i32, %arg1: i32) -> (i32, i32) {
    %c0_i32 = arith.constant 0 : i32
    %c0_i32_0 = arith.constant 0 : i32
    return %c0_i32, %arg1 : i32, i32
  }
  func.func @transform_3(%arg0: i32, %arg1: i32) -> (i32, i32) {
    %c0_i32 = arith.constant 0 : i32
    %c0_i32_0 = arith.constant 0 : i32
    return %c0_i32, %arg1 : i32, i32
  }
  func.func @transform_4(%arg0: i32, %arg1: i32) -> (i32, i32) {
    %c0_i32 = arith.constant 0 : i32
    return %arg0, %arg1 : i32, i32
  }
}

</mosaic_0001>

<llo_original>
// kernel: tpu_custom_call.1
$region0: #{tpu_custom_call.1}
  #allocation0 [shape = 'u32[]', space=smem, size = 0x4, offset = 0x4, fixed_abs, tag = 'smem constant byte address 0x4 - core index']
  #allocation1 [shape = 'u32[144,128]{1,0:T(1,128)}', space=vmem, size = 0x12000, scoped, tag = 'internal scratch']
  %s0 = inlined_call_operand.hbm [shape: f32[8,32], index: 0, kind: input, shape index: {}]
  %s1 = inlined_call_operand.hbm [shape: f32[8,8], index: 1, kind: input, shape index: {}]
  %s2 = inlined_call_operand.hbm [shape: f32[32,1024], index: 2, kind: input, shape index: {}]
  %s3 = inlined_call_operand.hbm [shape: f32[8,1024], index: 3, kind: input, shape index: {}]
  %s4 = inlined_call_operand.hbm [shape: f32[8,1024], index: 4, kind: output, shape index: {}]
  %s5 = sld [smem:[#allocation0]]
  $region65: #{tpu_custom_call.1} parent=0
    _
  %s7 = ssub.s32 1, %s5
  %s8 = scalar_select 0, %s7, %s5
  $region1: #{tpu_custom_call.1} parent=0
    #allocation2 [shape = 'u8[4096]{0}', space=vmem, size = 0x1000, scoped, tag = 'input window, operand 0, single buffered']
    #allocation3 [shape = 's32[2]{0}', space=sflag, size = 0x8, scoped, tag = 'scoped memory for tpu_custom_call.1']
    #allocation4 [shape = 's32[2]{0}', space=sflag, size = 0x8, scoped, tag = 'scoped memory for tpu_custom_call.1']
    #allocation5 [shape = 'u8[4096]{0}', space=vmem, size = 0x1000, scoped, tag = 'input window, operand 1, single buffered']
    #allocation6 [shape = 's32[1]{0}', space=sflag, size = 0x4, scoped, tag = 'scoped memory for tpu_custom_call.1']
    #allocation7 [shape = 'u8[131072]{0}', space=vmem, size = 0x20000, scoped, tag = 'input window, operand 2']
    #allocation8 [shape = 'u8[32768]{0}', space=vmem, size = 0x8000, scoped, tag = 'input window, operand 3']
    #allocation9 [shape = 'u8[32768]{0}', space=vmem, size = 0x8000, scoped, tag = 'output window, operand 0']
    %9 = vsyncpa [#allocation3], 0
    %10 = vsyncpa [#allocation6], 0
    %11 = vsyncpa [#allocation4], 0
    %s12 = scalar_lea.sflag [#allocation4], 1
    %13 = vsyncpa %s12, 0
    loop: start=0, step=1, limit=4
    $region2: #{tpu_custom_call.1} parent=1 // loop_pre_header
      _
    $region3: #{tpu_custom_call.1} parent=1 // loop_header
      %s15 = sphi 0, %s19
      %p16 = scmp.ge.s32.totalorder %s15, 4
      %s22 = sphi 0, %s34
      %s23 = sphi 0, %s30
      %s24 = sphi 0, %s22
      %s25 = sphi 0, %s23
      %s26 = sphi 0, %s24
      %s27 = sphi 0, %s25
      %s37 = sphi 0, %s39
      %s40 = sphi 0, %s37
      %s41 = sphi 0, %s40
      %s57 = sphi 0, %s41
      %s63 = sphi 0, %s65
      %s66 = sphi 0, %s63
      %s67 = sphi 0, %s66
      %s83 = sphi 0, %s67
      %s89 = sphi 0, %s91
      %s92 = sphi 0, %s89
      %s93 = sphi 0, %s92
      %s109 = sphi 0, %s93
      %s115 = sphi 0, %s117
      %s118 = sphi 0, %s115
      %s119 = sphi 0, %s118
      %s135 = sphi 0, %s119
      %s143 = sphi 0, %s145
      %s146 = sphi 0, %s143
      %s147 = sphi 0, %s146
      %s163 = sphi 0, %s147
    $region4: #{tpu_custom_call.1} parent=1 // loop_header_branch
      %18 = sbr.rel (%p16) target = $region8
    $region5: #{tpu_custom_call.1} parent=1 // loop_body
      %s20 = ssub.s32 %s15, 1
      %s21 = ssub.s32 %s15, 2
      %s28 = sadd.s32 1, %s23
      %p29 = scmp.ge.s32.totalorder %s28, 2
      %s30 = scalar_select %p29, 0, %s28
      %s31 = sadd.s32 1, %s22
      %s32 = scalar_select %p29, %s31, %s22
      %p33 = scmp.ge.s32.totalorder %s32, 1
      %s34 = scalar_select %p33, 0, %s32
      %s35 = ssub.s32 %s22, %s34
      %p36 = scmp.eq.s32.totalorder %s35, 0
      %s38 = sadd.s32 %s37, 1
      %s39 = scalar_select %p36, %s37, %s38
      %p42 = pneg %p36
      %p43 = scmp.eq.s32.totalorder %s15, 1
      %p44 = por %p42, %p43
      %p45 = scmp.ne.s32.totalorder %s37, %s40
      %p46 = scmp.eq.s32.totalorder %s15, 0
      %p47 = por %p45, %p46
      %p48 = scmp.ne.s32.totalorder %s37, %s40
      %p49 = scmp.eq.s32.totalorder %s20, 1
      %p50 = por %p48, %p49
      %p51 = scmp.ne.s32.totalorder %s40, %s41
      %p52 = scmp.eq.s32.totalorder %s20, 0
      %p53 = por %p51, %p52
      %p54 = scmp.ne.s32.totalorder %s40, %s41
      %p55 = scmp.eq.s32.totalorder %s21, 1
      %p56 = por %p54, %p55
      %p58 = scmp.ne.s32.totalorder %s41, %s57
      %p59 = scmp.eq.s32.totalorder %s21, 0
      %p60 = por %p58, %p59
      %s61 = ssub.s32 %s22, %s34
      %p62 = scmp.eq.s32.totalorder %s61, 0
      %s64 = sadd.s32 %s63, 1
      %s65 = scalar_select %p62, %s63, %s64
      %p68 = pneg %p62
      %p69 = scmp.eq.s32.totalorder %s15, 1
      %p70 = por %p68, %p69
      %p71 = scmp.ne.s32.totalorder %s63, %s66
      %p72 = scmp.eq.s32.totalorder %s15, 0
      %p73 = por %p71, %p72
      %p74 = scmp.ne.s32.totalorder %s63, %s66
      %p75 = scmp.eq.s32.totalorder %s20, 1
      %p76 = por %p74, %p75
      %p77 = scmp.ne.s32.totalorder %s66, %s67
      %p78 = scmp.eq.s32.totalorder %s20, 0
      %p79 = por %p77, %p78
      %p80 = scmp.ne.s32.totalorder %s66, %s67
      %p81 = scmp.eq.s32.totalorder %s21, 1
      %p82 = por %p80, %p81
      %p84 = scmp.ne.s32.totalorder %s67, %s83
      %p85 = scmp.eq.s32.totalorder %s21, 0
      %p86 = por %p84, %p85
      %s87 = ssub.s32 %s23, %s30
      %p88 = scmp.eq.s32.totalorder %s87, 0
      %s90 = sadd.s32 %s89, 1
      %s91 = scalar_select %p88, %s89, %s90
      %p94 = pneg %p88
      %p95 = scmp.eq.s32.totalorder %s15, 1
      %p96 = por %p94, %p95
      %p97 = scmp.ne.s32.totalorder %s89, %s92
      %p98 = scmp.eq.s32.totalorder %s15, 0
      %p99 = por %p97, %p98
      %p100 = scmp.ne.s32.totalorder %s89, %s92
      %p101 = scmp.eq.s32.totalorder %s20, 1
      %p102 = por %p100, %p101
      %p103 = scmp.ne.s32.totalorder %s92, %s93
      %p104 = scmp.eq.s32.totalorder %s20, 0
      %p105 = por %p103, %p104
      %p106 = scmp.ne.s32.totalorder %s92, %s93
      %p107 = scmp.eq.s32.totalorder %s21, 1
      %p108 = por %p106, %p107
      %p110 = scmp.ne.s32.totalorder %s93, %s109
      %p111 = scmp.eq.s32.totalorder %s21, 0
      %p112 = por %p110, %p111
      %s113 = ssub.s32 %s23, %s30
      %p114 = scmp.eq.s32.totalorder %s113, 0
      %s116 = sadd.s32 %s115, 1
      %s117 = scalar_select %p114, %s115, %s116
      %p120 = pneg %p114
      %p121 = scmp.eq.s32.totalorder %s15, 1
      %p122 = por %p120, %p121
      %p123 = scmp.ne.s32.totalorder %s115, %s118
      %p124 = scmp.eq.s32.totalorder %s15, 0
      %p125 = por %p123, %p124
      %p126 = scmp.ne.s32.totalorder %s115, %s118
      %p127 = scmp.eq.s32.totalorder %s20, 1
      %p128 = por %p126, %p127
      %p129 = scmp.ne.s32.totalorder %s118, %s119
      %p130 = scmp.eq.s32.totalorder %s20, 0
      %p131 = por %p129, %p130
      %p132 = scmp.ne.s32.totalorder %s118, %s119
      %p133 = scmp.eq.s32.totalorder %s21, 1
      %p134 = por %p132, %p133
      %p136 = scmp.ne.s32.totalorder %s119, %s135
      %p137 = scmp.eq.s32.totalorder %s21, 0
      %p138 = por %p136, %p137
      %s139 = ssub.s32 %s22, %s34
      %s140 = ssub.s32 %s23, %s30
      %s141 = sor.u32 %s139, %s140
      %p142 = scmp.eq.s32.totalorder %s141, 0
      %s144 = sadd.s32 %s143, 1
      %s145 = scalar_select %p142, %s143, %s144
      %p148 = pneg %p142
      %p149 = scmp.eq.s32.totalorder %s15, 1
      %p150 = por %p148, %p149
      %p151 = scmp.ne.s32.totalorder %s143, %s146
      %p152 = scmp.eq.s32.totalorder %s15, 0
      %p153 = por %p151, %p152
      %p154 = scmp.ne.s32.totalorder %s143, %s146
      %p155 = scmp.eq.s32.totalorder %s20, 1
      %p156 = por %p154, %p155
      %p157 = scmp.ne.s32.totalorder %s146, %s147
      %p158 = scmp.eq.s32.totalorder %s20, 0
      %p159 = por %p157, %p158
      %p160 = scmp.ne.s32.totalorder %s146, %s147
      %p161 = scmp.eq.s32.totalorder %s21, 1
      %p162 = por %p160, %p161
      %p164 = scmp.ne.s32.totalorder %s147, %s163
      %p165 = scmp.eq.s32.totalorder %s21, 0
      %p166 = por %p164, %p165
      %p167 = scmp.le.s32.totalorder 1, %s15
      %p168 = scmp.lt.s32.totalorder %s15, 3
      %p169 = pnand %p167, %p168
      %p170 = pneg %p169
      // Predicated region
      $region9: #{tpu_custom_call.1} parent=5 // pred_check
        _
      $region10: #{tpu_custom_call.1} parent=5 // pred_check_branch
        %172 = sbr.rel (%p169) target = $region12
      $region11: #{tpu_custom_call.1} parent=5 // pred_region
        %s173 = ssub.s32 %s15, 1
        // Predicated region
        $region13: #{tpu_custom_call.1} parent=11 // pred_check
          %p174 = pneg %p53
        $region14: #{tpu_custom_call.1} parent=11 // pred_check_branch
          %176 = sbr.rel (%p174) target = $region16
        $region15: #{tpu_custom_call.1} parent=11 // pred_region
          %s178 = ssub.s32 128, 128
          %179 = vsyncadd [#allocation3], %s178
          %s180 = smul.addr %s24, 128
          %s181 = scalar_lea.hbm %s0, %s180
          %s183 = sshll.u32 [#allocation2], 4
          %s184 = int_to_ptr.vmem [resolvable:$true] %s183
          %186 = dma.hbm_to_vmem [thread:$0]  %s181, 128, %s184, [#allocation3]
        $region16: #{tpu_custom_call.1} parent=11 // pred_fallthru
          _
        // Predicated region
        $region17: #{tpu_custom_call.1} parent=11 // pred_check
          %p187 = pneg %p79
        $region18: #{tpu_custom_call.1} parent=11 // pred_check_branch
          %189 = sbr.rel (%p187) target = $region20
        $region19: #{tpu_custom_call.1} parent=11 // pred_region
          %s191 = ssub.s32 128, 128
          %192 = vsyncadd [#allocation6], %s191
          %s193 = smul.addr %s24, 128
          %s194 = scalar_lea.hbm %s1, %s193
          %s196 = sshll.u32 [#allocation5], 4
          %s197 = int_to_ptr.vmem [resolvable:$true] %s196
          %199 = dma.hbm_to_vmem [thread:$0]  %s194, 128, %s197, [#allocation6]
        $region20: #{tpu_custom_call.1} parent=11 // pred_fallthru
          _
      $region12: #{tpu_custom_call.1} parent=5 // pred_fallthru
        _
      %p200 = scmp.lt.s32.totalorder %s15, 2
      // Predicated region
      $region21: #{tpu_custom_call.1} parent=5 // pred_check
        %p201 = pneg %p200
      $region22: #{tpu_custom_call.1} parent=5 // pred_check_branch
        %203 = sbr.rel (%p201) target = $region24
      $region23: #{tpu_custom_call.1} parent=5 // pred_region
        // Predicated region
        $region25: #{tpu_custom_call.1} parent=23 // pred_check
          %p204 = pneg %p99
        $region26: #{tpu_custom_call.1} parent=23 // pred_check_branch
          %206 = sbr.rel (%p204) target = $region28
        $region27: #{tpu_custom_call.1} parent=23 // pred_region
          %s207 = sand.u32 %s15, 1
          %s208 = scalar_lea.sflag [#allocation3], %s207
          %s209 = sand.u32 %s89, 1
          %s210 = smul.addr %s209, 128
          %s211 = scalar_lea.vmem [#allocation7], %s210
          %s212 = smul.u32 4, %s23
          %s214 = ssub.s32 2048, 2048
          %215 = vsyncadd %s208, %s214
          %s216 = smul.addr %s212, 128
          %s217 = scalar_lea.hbm %s2, %s216
          %s218 = sshll.u32 %s211, 4
          %s219 = int_to_ptr.vmem [resolvable:$true] %s218
          %224 = dma.hbm_to_vmem [thread:$0]  %s217, 2048, %s219, %s208, 1024, 512, 32
        $region28: #{tpu_custom_call.1} parent=23 // pred_fallthru
          _
        // Predicated region
        $region29: #{tpu_custom_call.1} parent=23 // pred_check
          %p225 = pneg %p125
        $region30: #{tpu_custom_call.1} parent=23 // pred_check_branch
          %227 = sbr.rel (%p225) target = $region32
        $region31: #{tpu_custom_call.1} parent=23 // pred_region
          %s228 = sand.u32 %s15, 1
          %s229 = scalar_lea.sflag [#allocation3], %s228
          %s230 = sand.u32 %s115, 1
          %s231 = smul.addr %s230, 32
          %s232 = scalar_lea.vmem [#allocation8], %s231
          %s233 = smul.u32 4, %s23
          %s235 = ssub.s32 512, 512
          %236 = vsyncadd %s229, %s235
          %s237 = smul.addr %s233, 128
          %s238 = scalar_lea.hbm %s3, %s237
          %s240 = sshll.u32 %s232, 4
          %s241 = int_to_ptr.vmem [resolvable:$true] %s240
          %243 = dma.hbm_to_vmem [thread:$0]  %s238, 512, %s241, %s229
        $region32: #{tpu_custom_call.1} parent=23 // pred_fallthru
          _
      $region24: #{tpu_custom_call.1} parent=5 // pred_fallthru
        _
      %p244 = scmp.le.s32.totalorder 1, %s15
      %p245 = scmp.lt.s32.totalorder %s15, 3
      %p246 = pnand %p244, %p245
      %p247 = pneg %p246
      // Predicated region
      $region33: #{tpu_custom_call.1} parent=5 // pred_check
        _
      $region34: #{tpu_custom_call.1} parent=5 // pred_check_branch
        %249 = sbr.rel (%p246) target = $region36
      $region35: #{tpu_custom_call.1} parent=5 // pred_region
        %s250 = ssub.s32 %s15, 1
        // Predicated region
        $region37: #{tpu_custom_call.1} parent=35 // pred_check
          %p251 = pneg %p53
        $region38: #{tpu_custom_call.1} parent=35 // pred_check_branch
          %253 = sbr.rel (%p251) target = $region40
        $region39: #{tpu_custom_call.1} parent=35 // pred_region
          %254 = dma.done [#allocation3], 128
        $region40: #{tpu_custom_call.1} parent=35 // pred_fallthru
          _
        // Predicated region
        $region41: #{tpu_custom_call.1} parent=35 // pred_check
          %p255 = pneg %p79
        $region42: #{tpu_custom_call.1} parent=35 // pred_check_branch
          %257 = sbr.rel (%p255) target = $region44
        $region43: #{tpu_custom_call.1} parent=35 // pred_region
          %258 = dma.done [#allocation6], 128
        $region44: #{tpu_custom_call.1} parent=35 // pred_fallthru
          _
        %s259 = sand.u32 %s20, 1
        %s260 = scalar_lea.sflag [#allocation3], %s259
        %s261 = sand.u32 %s92, 1
        %s262 = smul.addr %s261, 128
        %s263 = scalar_lea.vmem [#allocation7], %s262
        // Predicated region
        $region45: #{tpu_custom_call.1} parent=35 // pred_check
          %p264 = pneg %p105
        $region46: #{tpu_custom_call.1} parent=35 // pred_check_branch
          %266 = sbr.rel (%p264) target = $region48
        $region47: #{tpu_custom_call.1} parent=35 // pred_region
          %267 = dma.done %s260, 2048
        $region48: #{tpu_custom_call.1} parent=35 // pred_fallthru
          _
        %s268 = sand.u32 %s20, 1
        %s269 = scalar_lea.sflag [#allocation3], %s268
        %s270 = sand.u32 %s118, 1
        %s271 = smul.addr %s270, 32
        %s272 = scalar_lea.vmem [#allocation8], %s271
        // Predicated region
        $region49: #{tpu_custom_call.1} parent=35 // pred_check
          %p273 = pneg %p131
        $region50: #{tpu_custom_call.1} parent=35 // pred_check_branch
          %275 = sbr.rel (%p273) target = $region52
        $region51: #{tpu_custom_call.1} parent=35 // pred_region
          %276 = dma.done %s269, 512
        $region52: #{tpu_custom_call.1} parent=35 // pred_fallthru
          _
        %p277 = pneg %p53
        %p278 = pneg %p50
        %p279 = pneg %p79
        %p280 = pneg %p76
        %s281 = sand.u32 %s20, 1
        %s282 = scalar_lea.sflag [#allocation3], %s281
        %s283 = sand.u32 %s92, 1
        %s284 = smul.addr %s283, 128
        %s285 = scalar_lea.vmem [#allocation7], %s284
        %p286 = pneg %p105
        %p287 = pneg %p102
        %s288 = sand.u32 %s20, 1
        %s289 = scalar_lea.sflag [#allocation3], %s288
        %s290 = sand.u32 %s118, 1
        %s291 = smul.addr %s290, 32
        %s292 = scalar_lea.vmem [#allocation8], %s291
        %p293 = pneg %p131
        %p294 = pneg %p128
        %p295 = pneg %p159
        %p296 = pneg %p156
        %s297 = sand.u32 %s146, 1
        %s298 = scalar_lea.sflag [#allocation4], %s297
        %s299 = sand.u32 %s146, 1
        %s300 = smul.addr %s299, 32
        %s301 = scalar_lea.vmem [#allocation9], %s300
        %s302 = smul.u32 4, %s25
        %s303 = smul.u32 4, %s25
        %s304 = smul.u32 4, %s25
        %v305 = vld [vmem:[#allocation2] sm:$0xff]
        %v306 = vld [vmem:[%s263] sm:$0xff]
        %v307 = vld [vmem:[%s263 + $0x8] sm:$0xff]
        %v308 = vld [vmem:[%s263 + $0x10] sm:$0xff]
        %v309 = vld [vmem:[%s263 + $0x18] sm:$0xff]
        %v310 = vld [vmem:[%s263 + $0x20] sm:$0xff]
        %v311 = vld [vmem:[%s263 + $0x28] sm:$0xff]
        %v312 = vld [vmem:[%s263 + $0x30] sm:$0xff]
        %v313 = vld [vmem:[%s263 + $0x38] sm:$0xff]
        %v314 = vld [vmem:[%s263 + $0x40] sm:$0xff]
        %v315 = vld [vmem:[%s263 + $0x48] sm:$0xff]
        %v316 = vld [vmem:[%s263 + $0x50] sm:$0xff]
        %v317 = vld [vmem:[%s263 + $0x58] sm:$0xff]
        %v318 = vld [vmem:[%s263 + $0x60] sm:$0xff]
        %v319 = vld [vmem:[%s263 + $0x68] sm:$0xff]
        %v320 = vld [vmem:[%s263 + $0x70] sm:$0xff]
        %v321 = vld [vmem:[%s263 + $0x78] sm:$0xff]
        %vm322 = vcmask 261120
        %v324 = vsel %vm322, %v305, 0
        %326 = vmatprep.subr.mxu0 %v307
        %327 = vmatpush1.msra.mxu0 %v306
        %328 = vmatprep.subr.mxu0 %v311
        %329 = vmatpush1.msra.mxu0 %v310
        %330 = vmatprep.subr.mxu0 %v315
        %331 = vmatpush1.msra.mxu0 %v314
        %332 = vmatprep.subr.mxu0 %v319
        %333 = vmatpush1.msra.mxu0 %v318
        %334 = vmatprep.subr.mxu0 0.0
        %335 = vmatpush1.msra.mxu0 0.0
        %336 = vmatprep.subr.mxu0 0.0
        %337 = vmatpush1.msra.mxu0 0.0
        %338 = vmatprep.subr.mxu0 0.0
        %339 = vmatpush1.msra.mxu0 0.0
        %340 = vmatprep.subr.mxu0 0.0
        %341 = vmatpush1.msra.mxu0 0.0
        %342 = vmatprep.subr.mxu0 0.0
        %343 = vmatpush1.msra.mxu0 0.0
        %344 = vmatprep.subr.mxu0 0.0
        %345 = vmatpush1.msra.mxu0 0.0
        %346 = vmatprep.subr.mxu0 0.0
        %347 = vmatpush1.msra.mxu0 0.0
        %348 = vmatprep.subr.mxu0 0.0
        %349 = vmatpush1.msra.mxu0 0.0
        %350 = vmatprep.subr.mxu0 0.0
        %351 = vmatpush1.msra.mxu0 0.0
        %352 = vmatprep.subr.mxu0 0.0
        %353 = vmatpush1.msra.mxu0 0.0
        %354 = vmatprep.subr.mxu0 0.0
        %355 = vmatpush1.msra.mxu0 0.0
        %356 = vmatprep.subr.mxu0 0.0
        %357 = vmatpush1.msra.mxu0 0.0
        %358 = vmatprep.subr.mxu0 0.0
        %359 = vmatpush1.msra.mxu0 0.0
        %360 = vmatprep.subr.mxu0 0.0
        %361 = vmatpush1.msra.mxu0 0.0
        %362 = vmatprep.subr.mxu0 0.0
        %363 = vmatpush1.msra.mxu0 0.0
        %364 = vmatprep.subr.mxu0 0.0
        %365 = vmatpush1.msra.mxu0 0.0
        %366 = vmatprep.subr.mxu0 0.0
        %367 = vmatpush1.msra.mxu0 0.0
        %368 = vmatprep.subr.mxu0 0.0
        %369 = vmatpush1.msra.mxu0 0.0
        %370 = vmatprep.subr.mxu0 0.0
        %371 = vmatpush1.msra.mxu0 0.0
        %372 = vmatprep.subr.mxu0 0.0
        %373 = vmatpush1.msra.mxu0 0.0
        %374 = vmatprep.subr.mxu0 0.0
        %375 = vmatpush1.msra.mxu0 0.0
        %376 = vmatprep.subr.mxu0 0.0
        %377 = vmatpush1.msra.mxu0 0.0
        %378 = vmatprep.subr.mxu0 0.0
        %379 = vmatpush1.msra.mxu0 0.0
        %380 = vmatprep.subr.mxu0 0.0
        %381 = vmatpush1.msra.mxu0 0.0
        %382 = vmatprep.subr.mxu0 0.0
        %383 = vmatpush1.msra.mxu0 0.0
        %384 = vmatprep.subr.mxu0 0.0
        %385 = vmatpush1.msra.mxu0 0.0
        %386 = vmatprep.subr.mxu0 0.0
        %387 = vmatpush1.msra.mxu0 0.0
        %388 = vmatprep.subr.mxu0 0.0
        %389 = vmatpush1.msra.mxu0 0.0
        %390 = vmatprep.mubr.f32.mxu0 0.0
        %391 = vmatmul.mubr.f32.gmra.mrb[0].mxu0 %v324
        %v392 = vpop.f32.mrb[0].mxu0
        %v393 = vadd.f32 0.0, %v392
        %v394 = vpop.f32.mrb[0].mxu0
        %v395 = vadd.f32 0.0, %v394
        %396 = vdwg.mxu0
        %397 = vmatprep.subr.mxu0 %v309
        %398 = vmatpush1.msra.mxu0 %v308
        %399 = vmatprep.subr.mxu0 %v313
        %400 = vmatpush1.msra.mxu0 %v312
        %401 = vmatprep.subr.mxu0 %v317
        %402 = vmatpush1.msra.mxu0 %v316
        %403 = vmatprep.subr.mxu0 %v321
        %404 = vmatpush1.msra.mxu0 %v320
        %405 = vmatprep.subr.mxu0 0.0
        %406 = vmatpush1.msra.mxu0 0.0
        %407 = vmatprep.subr.mxu0 0.0
        %408 = vmatpush1.msra.mxu0 0.0
        %409 = vmatprep.subr.mxu0 0.0
        %410 = vmatpush1.msra.mxu0 0.0
        %411 = vmatprep.subr.mxu0 0.0
        %412 = vmatpush1.msra.mxu0 0.0
        %413 = vmatprep.subr.mxu0 0.0
        %414 = vmatpush1.msra.mxu0 0.0
        %415 = vmatprep.subr.mxu0 0.0
        %416 = vmatpush1.msra.mxu0 0.0
        %417 = vmatprep.subr.mxu0 0.0
        %418 = vmatpush1.msra.mxu0 0.0
        %419 = vmatprep.subr.mxu0 0.0
        %420 = vmatpush1.msra.mxu0 0.0
        %421 = vmatprep.subr.mxu0 0.0
        %422 = vmatpush1.msra.mxu0 0.0
        %423 = vmatprep.subr.mxu0 0.0
        %424 = vmatpush1.msra.mxu0 0.0
        %425 = vmatprep.subr.mxu0 0.0
        %426 = vmatpush1.msra.mxu0 0.0
        %427 = vmatprep.subr.mxu0 0.0
        %428 = vmatpush1.msra.mxu0 0.0
        %429 = vmatprep.subr.mxu0 0.0
        %430 = vmatpush1.msra.mxu0 0.0
        %431 = vmatprep.subr.mxu0 0.0
        %432 = vmatpush1.msra.mxu0 0.0
        %433 = vmatprep.subr.mxu0 0.0
        %434 = vmatpush1.msra.mxu0 0.0
        %435 = vmatprep.subr.mxu0 0.0
        %436 = vmatpush1.msra.mxu0 0.0
        %437 = vmatprep.subr.mxu0 0.0
        %438 = vmatpush1.msra.mxu0 0.0
        %439 = vmatprep.subr.mxu0 0.0
        %440 = vmatpush1.msra.mxu0 0.0
        %441 = vmatprep.subr.mxu0 0.0
        %442 = vmatpush1.msra.mxu0 0.0
        %443 = vmatprep.subr.mxu0 0.0
        %444 = vmatpush1.msra.mxu0 0.0
        %445 = vmatprep.subr.mxu0 0.0
        %446 = vmatpush1.msra.mxu0 0.0
        %447 = vmatprep.subr.mxu0 0.0
        %448 = vmatpush1.msra.mxu0 0.0
        %449 = vmatprep.subr.mxu0 0.0
        %450 = vmatpush1.msra.mxu0 0.0
        %451 = vmatprep.subr.mxu0 0.0
        %452 = vmatpush1.msra.mxu0 0.0
        %453 = vmatprep.subr.mxu0 0.0
        %454 = vmatpush1.msra.mxu0 0.0
        %455 = vmatprep.subr.mxu0 0.0
        %456 = vmatpush1.msra.mxu0 0.0
        %457 = vmatprep.subr.mxu0 0.0
        %458 = vmatpush1.msra.mxu0 0.0
        %459 = vmatprep.subr.mxu0 0.0
        %460 = vmatpush1.msra.mxu0 0.0
        %461 = vmatprep.mubr.f32.mxu0 0.0
        %462 = vmatmul.mubr.f32.gmra.mrb[0].mxu0 %v324
        %v463 = vpop.f32.mrb[0].mxu0
        %v464 = vadd.f32 0.0, %v463
        %v465 = vpop.f32.mrb[0].mxu0
        %v466 = vadd.f32 0.0, %v465
        %467 = vdwg.mxu0
        %v468 = vld [vmem:[#allocation5] sm:$0xff]
        %v469 = vld [vmem:[%s272] sm:$0xff]
        %v470 = vld [vmem:[%s272 + $0x8] sm:$0xff]
        %v471 = vld [vmem:[%s272 + $0x10] sm:$0xff]
        %v472 = vld [vmem:[%s272 + $0x18] sm:$0xff]
        %vm473 = vcmask 64512
        %v475 = vsel %vm473, %v468, 0
        %477 = vmatprep.subr.mxu0 %v470
        %478 = vmatpush1.msra.mxu0 %v469
        %479 = vmatprep.subr.mxu0 0.0
        %480 = vmatpush1.msra.mxu0 0.0
        %481 = vmatprep.subr.mxu0 0.0
        %482 = vmatpush1.msra.mxu0 0.0
        %483 = vmatprep.subr.mxu0 0.0
        %484 = vmatpush1.msra.mxu0 0.0
        %485 = vmatprep.subr.mxu0 0.0
        %486 = vmatpush1.msra.mxu0 0.0
        %487 = vmatprep.subr.mxu0 0.0
        %488 = vmatpush1.msra.mxu0 0.0
        %489 = vmatprep.subr.mxu0 0.0
        %490 = vmatpush1.msra.mxu0 0.0
        %491 = vmatprep.subr.mxu0 0.0
        %492 = vmatpush1.msra.mxu0 0.0
        %493 = vmatprep.subr.mxu0 0.0
        %494 = vmatpush1.msra.mxu0 0.0
        %495 = vmatprep.subr.mxu0 0.0
        %496 = vmatpush1.msra.mxu0 0.0
        %497 = vmatprep.subr.mxu0 0.0
        %498 = vmatpush1.msra.mxu0 0.0
        %499 = vmatprep.subr.mxu0 0.0
        %500 = vmatpush1.msra.mxu0 0.0
        %501 = vmatprep.subr.mxu0 0.0
        %502 = vmatpush1.msra.mxu0 0.0
        %503 = vmatprep.subr.mxu0 0.0
        %504 = vmatpush1.msra.mxu0 0.0
        %505 = vmatprep.subr.mxu0 0.0
        %506 = vmatpush1.msra.mxu0 0.0
        %507 = vmatprep.subr.mxu0 0.0
        %508 = vmatpush1.msra.mxu0 0.0
        %509 = vmatprep.subr.mxu0 0.0
        %510 = vmatpush1.msra.mxu0 0.0
        %511 = vmatprep.subr.mxu0 0.0
        %512 = vmatpush1.msra.mxu0 0.0
        %513 = vmatprep.subr.mxu0 0.0
        %514 = vmatpush1.msra.mxu0 0.0
        %515 = vmatprep.subr.mxu0 0.0
        %516 = vmatpush1.msra.mxu0 0.0
        %517 = vmatprep.subr.mxu0 0.0
        %518 = vmatpush1.msra.mxu0 0.0
        %519 = vmatprep.subr.mxu0 0.0
        %520 = vmatpush1.msra.mxu0 0.0
        %521 = vmatprep.subr.mxu0 0.0
        %522 = vmatpush1.msra.mxu0 0.0
        %523 = vmatprep.subr.mxu0 0.0
        %524 = vmatpush1.msra.mxu0 0.0
        %525 = vmatprep.subr.mxu0 0.0
        %526 = vmatpush1.msra.mxu0 0.0
        %527 = vmatprep.subr.mxu0 0.0
        %528 = vmatpush1.msra.mxu0 0.0
        %529 = vmatprep.subr.mxu0 0.0
        %530 = vmatpush1.msra.mxu0 0.0
        %531 = vmatprep.subr.mxu0 0.0
        %532 = vmatpush1.msra.mxu0 0.0
        %533 = vmatprep.subr.mxu0 0.0
        %534 = vmatpush1.msra.mxu0 0.0
        %535 = vmatprep.subr.mxu0 0.0
        %536 = vmatpush1.msra.mxu0 0.0
        %537 = vmatprep.subr.mxu0 0.0
        %538 = vmatpush1.msra.mxu0 0.0
        %539 = vmatprep.subr.mxu0 0.0
        %540 = vmatpush1.msra.mxu0 0.0
        %541 = vmatprep.mubr.f32.mxu0 0.0
        %542 = vmatmul.mubr.f32.gmra.mrb[0].mxu0 %v475
        %v543 = vpop.f32.mrb[0].mxu0
        %v544 = vadd.f32 0.0, %v543
        %v545 = vpop.f32.mrb[0].mxu0
        %v546 = vadd.f32 0.0, %v545
        %547 = vdwg.mxu0
        %548 = vmatprep.subr.mxu0 %v472
        %549 = vmatpush1.msra.mxu0 %v471
        %550 = vmatprep.subr.mxu0 0.0
        %551 = vmatpush1.msra.mxu0 0.0
        %552 = vmatprep.subr.mxu0 0.0
        %553 = vmatpush1.msra.mxu0 0.0
        %554 = vmatprep.subr.mxu0 0.0
        %555 = vmatpush1.msra.mxu0 0.0
        %556 = vmatprep.subr.mxu0 0.0
        %557 = vmatpush1.msra.mxu0 0.0
        %558 = vmatprep.subr.mxu0 0.0
        %559 = vmatpush1.msra.mxu0 0.0
        %560 = vmatprep.subr.mxu0 0.0
        %561 = vmatpush1.msra.mxu0 0.0
        %562 = vmatprep.subr.mxu0 0.0
        %563 = vmatpush1.msra.mxu0 0.0
        %564 = vmatprep.subr.mxu0 0.0
        %565 = vmatpush1.msra.mxu0 0.0
        %566 = vmatprep.subr.mxu0 0.0
        %567 = vmatpush1.msra.mxu0 0.0
        %568 = vmatprep.subr.mxu0 0.0
        %569 = vmatpush1.msra.mxu0 0.0
        %570 = vmatprep.subr.mxu0 0.0
        %571 = vmatpush1.msra.mxu0 0.0
        %572 = vmatprep.subr.mxu0 0.0
        %573 = vmatpush1.msra.mxu0 0.0
        %574 = vmatprep.subr.mxu0 0.0
        %575 = vmatpush1.msra.mxu0 0.0
        %576 = vmatprep.subr.mxu0 0.0
        %577 = vmatpush1.msra.mxu0 0.0
        %578 = vmatprep.subr.mxu0 0.0
        %579 = vmatpush1.msra.mxu0 0.0
        %580 = vmatprep.subr.mxu0 0.0
        %581 = vmatpush1.msra.mxu0 0.0
        %582 = vmatprep.subr.mxu0 0.0
        %583 = vmatpush1.msra.mxu0 0.0
        %584 = vmatprep.subr.mxu0 0.0
        %585 = vmatpush1.msra.mxu0 0.0
        %586 = vmatprep.subr.mxu0 0.0
        %587 = vmatpush1.msra.mxu0 0.0
        %588 = vmatprep.subr.mxu0 0.0
        %589 = vmatpush1.msra.mxu0 0.0
        %590 = vmatprep.subr.mxu0 0.0
        %591 = vmatpush1.msra.mxu0 0.0
        %592 = vmatprep.subr.mxu0 0.0
        %593 = vmatpush1.msra.mxu0 0.0
        %594 = vmatprep.subr.mxu0 0.0
        %595 = vmatpush1.msra.mxu0 0.0
        %596 = vmatprep.subr.mxu0 0.0
        %597 = vmatpush1.msra.mxu0 0.0
        %598 = vmatprep.subr.mxu0 0.0
        %599 = vmatpush1.msra.mxu0 0.0
        %600 = vmatprep.subr.mxu0 0.0
        %601 = vmatpush1.msra.mxu0 0.0
        %602 = vmatprep.subr.mxu0 0.0
        %603 = vmatpush1.msra.mxu0 0.0
        %604 = vmatprep.subr.mxu0 0.0
        %605 = vmatpush1.msra.mxu0 0.0
        %606 = vmatprep.subr.mxu0 0.0
        %607 = vmatpush1.msra.mxu0 0.0
        %608 = vmatprep.subr.mxu0 0.0
        %609 = vmatpush1.msra.mxu0 0.0
        %610 = vmatprep.subr.mxu0 0.0
        %611 = vmatpush1.msra.mxu0 0.0
        %612 = vmatprep.mubr.f32.mxu0 0.0
        %613 = vmatmul.mubr.f32.gmra.mrb[0].mxu0 %v475
        %v614 = vpop.f32.mrb[0].mxu0
        %v615 = vadd.f32 0.0, %v614
        %v616 = vpop.f32.mrb[0].mxu0
        %v617 = vadd.f32 0.0, %v616
        %618 = vdwg.mxu0
        %v619 = vmul.f32 %v393, %v544
        %v620 = vmul.f32 %v395, %v546
        %v621 = vmul.f32 %v464, %v615
        %v622 = vmul.f32 %v466, %v617
        %v623 = vmul.f32 %v619, 0.03125
        %v624 = vmul.f32 %v620, 0.03125
        %v625 = vmul.f32 %v621, 0.03125
        %v626 = vmul.f32 %v622, 0.03125
        %627 = vst [vmem:[%s301] sm:$0xff] %v623
        %628 = vst [vmem:[%s301 + $0x8] sm:$0xff] %v624
        %629 = vst [vmem:[%s301 + $0x10] sm:$0xff] %v625
        %630 = vst [vmem:[%s301 + $0x18] sm:$0xff] %v626
        %s631 = sand.u32 %s146, 1
        %s632 = scalar_lea.sflag [#allocation4], %s631
        %s633 = sand.u32 %s146, 1
        %s634 = smul.addr %s633, 32
        %s635 = scalar_lea.vmem [#allocation9], %s634
        // Predicated region
        $region53: #{tpu_custom_call.1} parent=35 // pred_check
          %p636 = pneg %p156
        $region54: #{tpu_custom_call.1} parent=35 // pred_check_branch
          %638 = sbr.rel (%p636) target = $region56
        $region55: #{tpu_custom_call.1} parent=35 // pred_region
          %s639 = smul.u32 4, %s25
          %s641 = ssub.s32 512, 512
          %642 = vsyncadd %s632, %s641
          %s643 = smul.addr %s24, 8
          %s644 = sadd.s32 %s639, %s643
          %s645 = smul.addr %s644, 128
          %s646 = scalar_lea.hbm %s4, %s645
          %s648 = sshll.u32 %s635, 4
          %s649 = int_to_ptr.vmem [resolvable:$true] %s648
          %651 = dma.vmem_to_hbm [thread:$0]  %s649, 512, %s646, %s632
        $region56: #{tpu_custom_call.1} parent=35 // pred_fallthru
          _
      $region36: #{tpu_custom_call.1} parent=5 // pred_fallthru
        _
      %p652 = scmp.le.s32.totalorder 2, %s15
      // Predicated region
      $region57: #{tpu_custom_call.1} parent=5 // pred_check
        %p653 = pneg %p652
      $region58: #{tpu_custom_call.1} parent=5 // pred_check_branch
        %655 = sbr.rel (%p653) target = $region60
      $region59: #{tpu_custom_call.1} parent=5 // pred_region
        %s656 = ssub.s32 %s15, 2
        // Predicated region
        $region61: #{tpu_custom_call.1} parent=59 // pred_check
          %p657 = pneg %p162
        $region62: #{tpu_custom_call.1} parent=59 // pred_check_branch
          %659 = sbr.rel (%p657) target = $region64
        $region63: #{tpu_custom_call.1} parent=59 // pred_region
          %s660 = sand.u32 %s147, 1
          %s661 = scalar_lea.sflag [#allocation4], %s660
          %s662 = sand.u32 %s147, 1
          %s663 = smul.addr %s662, 32
          %s664 = scalar_lea.vmem [#allocation9], %s663
          %665 = dma.done %s661, 512
        $region64: #{tpu_custom_call.1} parent=59 // pred_fallthru
          _
      $region60: #{tpu_custom_call.1} parent=5 // pred_fallthru
        _
    $region6: #{tpu_custom_call.1} parent=1 // loop_footer
      %s19 = sadd.s32 1, %s15
    $region7: #{tpu_custom_call.1} parent=1 // loop_footer_branch
      %14 = sbr.rel target = $region3
    $region8: #{tpu_custom_call.1} parent=1 // loop_exit
      _
    %666 = vsyncpa [#allocation3], 1
    %s667 = scalar_lea.sflag [#allocation3], 1
    %668 = vsyncpa %s667, 1
    %669 = vsyncpa [#allocation6], 1
    %670 = vsyncpa [#allocation4], 1
    %s671 = scalar_lea.sflag [#allocation4], 1
    %672 = vsyncpa %s671, 1

</llo_original>
